<compile_context>
chip_gen: v7x
topology: tpu7x:2x2x1
jax: 0.10.0
libtpu: 0.0.40
codegen_flags: <defaults>
</compile_context>

<pallas_src>
import jax
import jax.numpy as jnp
from jax.experimental import pallas as pl
from jax.experimental.pallas import tpu as pltpu

NEG_SLOPE = 0.01  # F.leaky_relu default negative_slope


def _leaky_relu(x):
    return jnp.where(x >= 0, x, NEG_SLOPE * x)


# --------------------- pass 1: h1 = leaky_relu(Ahat @ X @ W1 + b1) ---------------------
def _layer1_kernel(a_ref, x_ref, w1_ref, b1_ref, h1_ref, acc_ref):
    k = pl.program_id(1)
    tk = a_ref.shape[1]

    @pl.when(k == 0)
    def _():
        acc_ref[...] = jnp.zeros_like(acc_ref)

    # Stream Ahat row-tile over k; X is fully VMEM-resident -> slice the k chunk.
    start = pl.multiple_of(k * tk, tk)
    x_blk = x_ref[pl.ds(start, tk), :]                                    # (tk, F) bf16
    acc_ref[...] += jnp.dot(a_ref[...], x_blk,
                            preferred_element_type=jnp.float32)           # f32 accumulate

    @pl.when(k == pl.num_programs(1) - 1)
    def _():
        h = jnp.dot(acc_ref[...].astype(jnp.bfloat16), w1_ref[...],
                    preferred_element_type=jnp.float32) + b1_ref[...]      # (tm, H)
        h1_ref[...] = _leaky_relu(h).astype(h1_ref.dtype)                  # store bf16


# ------ pass 2: v = (Ahat @ h1) @ wcomb + bcomb  (layer2 + agg folded, per-row output) ------
def _layer2_kernel(a_ref, h1_ref, wcomb_ref, bcomb_ref, v_ref, acc_ref):
    k = pl.program_id(1)
    tk = a_ref.shape[1]

    @pl.when(k == 0)
    def _():
        acc_ref[...] = jnp.zeros_like(acc_ref)

    start = pl.multiple_of(k * tk, tk)
    h1_blk = h1_ref[pl.ds(start, tk), :]                                   # (tk, H) bf16
    acc_ref[...] += jnp.dot(a_ref[...], h1_blk,
                            preferred_element_type=jnp.float32)            # (tm, H) f32

    @pl.when(k == pl.num_programs(1) - 1)
    def _():
        # Folded layer2+agg: elementwise multiply by wcomb row + lane reduce (f32).
        v_ref[...] = (jnp.sum(acc_ref[...] * wcomb_ref[...],
                              axis=1, keepdims=True) + bcomb_ref[...])     # (tm, 1)


# --------- pass 3: tiny dense head (dense_1 reduction + dense_2/dense_3), single step ---------
def _head_kernel(v_ref, wd1_ref, bd1_ref, wd2_ref, bd2_ref, wd3_ref, bd3_ref, out_ref):
    # dense_1: v.reshape(1, N) @ Wd1 == sum_n v[n] * Wd1[n, :]   (Dropout -> identity)
    z1 = jnp.sum(v_ref[...] * wd1_ref[...], axis=0, keepdims=True) + bd1_ref[...]   # (1, 100)
    z2 = _leaky_relu(jnp.dot(z1, wd2_ref[...],
                             preferred_element_type=jnp.float32) + bd2_ref[...])     # (1, 20)
    out_ref[...] = jnp.dot(z2, wd3_ref[...],
                           preferred_element_type=jnp.float32) + bd3_ref[...]        # (1, C)


def gcn_bl_forward(a_hat, x, params, *, tm=None, tk=None):
    (w1, b1, w2, b2, wagg, bagg, wd1, bd1, wd2, bd2, wd3, bd3) = params
    n, f = x.shape
    h = w1.shape[1]
    c = wd3.shape[1]

    tm = min(512, n) if tm is None else tm
    tk = min(512, n) if tk is None else tk
    assert n % tm == 0 and n % tk == 0, "pad N (and Wd1 rows, with zeros) to a tile multiple"
    grid = (n // tm, n // tk)

    # bf16 operands for the MXU streams; f32 accumulation happens in the kernels.
    a_bf16 = a_hat.astype(jnp.bfloat16)
    x_bf16 = x.astype(jnp.bfloat16)
    w1_bf16 = w1.astype(jnp.bfloat16)

    # Host-side fold of layer2 + agg (exact in f32):
    #   v = (Ahat @ h1) @ W2 @ Wagg + b2 @ Wagg + bagg = (Ahat @ h1) @ wcomb + bcomb
    wcomb_row = (w2 @ wagg).reshape(1, h)                                  # (1, H) f32
    bcomb = b2 @ wagg + bagg                                               # (1, 1) f32

    const = lambda i, k: (0, 0)
    cparams = pltpu.CompilerParams(
        dimension_semantics=("parallel", "arbitrary"),   # row tiles independent in both passes
        vmem_limit_bytes=32 * 1024 * 1024)               # conservative; safe on v7x's 64 MiB

    # ---- pass 1: h1 = leaky_relu(Ahat @ X @ W1 + b1), emitted in bf16 ----
    h1 = pl.pallas_call(
        _layer1_kernel,
        out_shape=jax.ShapeDtypeStruct((n, h), jnp.bfloat16),
        grid_spec=pltpu.PrefetchScalarGridSpec(
            num_scalar_prefetch=0,
            grid=grid,
            in_specs=[
                pl.BlockSpec((tm, tk), lambda i, k: (i, k)),   # Ahat tile (bf16 stream)
                pl.BlockSpec((n, f), const),                   # X fully VMEM-resident (bf16)
                pl.BlockSpec((f, h), const),                   # W1 (bf16)
                pl.BlockSpec((1, h), const),                   # b1 (f32)
            ],
            out_specs=pl.BlockSpec((tm, h), lambda i, k: (i, 0)),
            scratch_shapes=[pltpu.VMEM((tm, f), jnp.float32)]),
        compiler_params=cparams,
    )(a_bf16, x_bf16, w1_bf16, b1)

    # ---- pass 2: v = (Ahat @ h1) @ wcomb + bcomb, per-row output (parallel row axis) ----
    v = pl.pallas_call(
        _layer2_kernel,
        out_shape=jax.ShapeDtypeStruct((n, 1), jnp.float32),
        grid_spec=pltpu.PrefetchScalarGridSpec(
            num_scalar_prefetch=0,
            grid=grid,
            in_specs=[
                pl.BlockSpec((tm, tk), lambda i, k: (i, k)),   # Ahat tile (bf16 stream)
                pl.BlockSpec((n, h), const),                   # h1 fully VMEM-resident (bf16)
                pl.BlockSpec((1, h), const),                   # wcomb row (f32)
                pl.BlockSpec((1, 1), const),                   # bcomb (f32)
            ],
            out_specs=pl.BlockSpec((tm, 1), lambda i, k: (i, 0)),
            scratch_shapes=[pltpu.VMEM((tm, h), jnp.float32)]),
        compiler_params=cparams,
    )(a_bf16, h1, wcomb_row, bcomb)

    # ---- pass 3: dense_1 reduction + dense_2/dense_3 head (single step, f32) ----
    one = lambda i: (0, 0)
    out = pl.pallas_call(
        _head_kernel,
        out_shape=jax.ShapeDtypeStruct((1, c), jnp.float32),
        grid_spec=pltpu.PrefetchScalarGridSpec(
            num_scalar_prefetch=0,
            grid=(1,),
            in_specs=[
                pl.BlockSpec((n, 1), one),      # v
                pl.BlockSpec((n, 100), one),    # Wd1
                pl.BlockSpec((1, 100), one),    # bd1
                pl.BlockSpec((100, 20), one),   # Wd2
                pl.BlockSpec((1, 20), one),     # bd2
                pl.BlockSpec((20, c), one),     # Wd3
                pl.BlockSpec((1, c), one),      # bd3
            ],
            out_specs=pl.BlockSpec((1, c), one)),
        compiler_params=pltpu.CompilerParams(
            dimension_semantics=("arbitrary",),
            vmem_limit_bytes=32 * 1024 * 1024),
    )(v, wd1, bd1, wd2, bd2, wd3, bd3)
    return out


# ---------------- plain-JAX f32 reference (module semantics, eval mode) ----------------
def reference_forward_f32(a_hat, x, params):
    (w1, b1, w2, b2, wagg, bagg, wd1, bd1, wd2, bd2, wd3, bd3) = params
    h1 = _leaky_relu(a_hat @ x @ w1 + b1)
    h2 = a_hat @ h1 @ w2 + b2
    v = h2 @ wagg + bagg                       # (N, 1); Dropout(0.5) -> identity
    z1 = v.reshape(1, -1) @ wd1 + bd1          # (1, 100)
    z2 = _leaky_relu(z1 @ wd2 + bd2)           # (1, 20)
    return z2 @ wd3 + bd3                      # (1, C)


def _linear_params(key, fan_in, fan_out):
    kw, kb = jax.random.split(key)
    bound = 1.0 / float(fan_in) ** 0.5
    w = jax.random.uniform(kw, (fan_in, fan_out), jnp.float32, -bound, bound)
    b = jax.random.uniform(kb, (1, fan_out), jnp.float32, -bound, bound)
    return w, b


if __name__ == "__main__":
    # in_size == hidden_size == 32 (required by the original module's layer2), C = 3 classes
    N, F, H, C = 256, 32, 32, 3

    key = jax.random.PRNGKey(0)
    keys = jax.random.split(key, 8)

    x = jax.random.normal(keys[0], (N, F), jnp.float32)          # G.features

    # Random graph A (A[i, j] = edge j -> i); Ahat = D_in^{-1/2} A D_out^{-1/2}
    # (DGL GraphConv norm='both'; allow_zero_in_degree=True -> zero degrees get norm 0).
    adj = (jax.random.uniform(keys[1], (N, N)) < 0.05).astype(jnp.float32)
    adj = adj * (1.0 - jnp.eye(N, dtype=jnp.float32))
    deg_in = jnp.sum(adj, axis=1)
    deg_out = jnp.sum(adj, axis=0)
    inv_sqrt_in = jnp.where(deg_in > 0, 1.0 / jnp.sqrt(deg_in), 0.0)
    inv_sqrt_out = jnp.where(deg_out > 0, 1.0 / jnp.sqrt(deg_out), 0.0)
    a_hat = adj * inv_sqrt_in[:, None] * inv_sqrt_out[None, :]

    # Synthetic deterministic parameters (shapes from __init__, weights stored as (in, out)).
    w1, b1 = _linear_params(keys[2], F, H)        # layer1: GraphConv(in_size, hidden_size)
    w2, b2 = _linear_params(keys[3], H, H)        # layer2: GraphConv(in_size, hidden_size)
    wagg, bagg = _linear_params(keys[4], H, 1)    # agg:    Linear(hidden_size, 1)
    wd1, bd1 = _linear_params(keys[5], N, 100)    # dense_1: Linear(N, 100)
    wd2, bd2 = _linear_params(keys[6], 100, 20)   # dense_2: Linear(100, 20)
    wd3, bd3 = _linear_params(keys[7], 20, C)     # dense_3: Linear(20, num_classes)
    params = (w1, b1, w2, b2, wagg, bagg, wd1, bd1, wd2, bd2, wd3, bd3)

    out = jax.block_until_ready(gcn_bl_forward(a_hat, x, params))

    ref = reference_forward_f32(a_hat, x, params)
    assert out.shape == (1, C), out.shape
    max_err = float(jnp.max(jnp.abs(out - ref)))
    assert jnp.allclose(out, ref, atol=3e-2, rtol=3e-2), (out, ref, max_err)

    print("KERNEL_OK")
</pallas_src>

<mosaic_0001>
module attributes {stable_mosaic.version = 11 : i64} {
  func.func @_layer1_kernel(%arg0: i32, %arg1: i32, %arg2: memref<256x256xbf16, #tpu.memory_space<vmem>>, %arg3: memref<256x32xbf16, #tpu.memory_space<vmem>>, %arg4: memref<32x32xbf16, #tpu.memory_space<vmem>>, %arg5: memref<1x32xf32, #tpu.memory_space<vmem>>, %arg6: memref<256x32xbf16, #tpu.memory_space<vmem>>, %arg7: memref<256x32xf32, #tpu.memory_space<vmem>>) attributes {dimension_semantics = [#tpu.dimension_semantics<parallel>, #tpu.dimension_semantics<arbitrary>], iteration_bounds = array<i64: 1, 1>, scalar_prefetch = 0 : i64, scratch_operands = 1 : i64, tpu.core_type = #tpu.core_type<tc>, window_params = [{transform_indices = @transform_0, window_bounds = array<i64: 256, 256>}, {pipeline_mode = #tpu.pipeline_mode<synchronous>, transform_indices = @transform_1, window_bounds = array<i64: 256, 32>}, {pipeline_mode = #tpu.pipeline_mode<synchronous>, transform_indices = @transform_2, window_bounds = array<i64: 32, 32>}, {pipeline_mode = #tpu.pipeline_mode<synchronous>, transform_indices = @transform_3, window_bounds = array<i64: 1, 32>}, {transform_indices = @transform_4, window_bounds = array<i64: 256, 32>}]} {
    %c0_i32 = arith.constant 0 : i32
    %0 = arith.cmpi eq, %arg1, %c0_i32 : i32
    %1 = arith.extui %0 : i1 to i32
    %c0_i32_0 = arith.constant 0 : i32
    %2 = arith.cmpi ne, %1, %c0_i32_0 : i32
    scf.if %2 {
      %cst_9 = arith.constant 0.000000e+00 : f32
      %15 = vector.broadcast %cst_9 : f32 to vector<256x32xf32>
      %c0_10 = arith.constant 0 : index
      %c0_11 = arith.constant 0 : index
      %16 = vector.load %arg7[%c0_10, %c0_11] : memref<256x32xf32, #tpu.memory_space<vmem>>, vector<256x32xf32>
      tpu.vector_store %arg7[%c0_10, %c0_11], %15 {strides = array<i32>} : memref<256x32xf32, #tpu.memory_space<vmem>>, vector<256x32xf32>,
    } else {
    }
    %c256_i32 = arith.constant 256 : i32
    %3 = arith.muli %arg1, %c256_i32 : i32
    %4 = tpu.assume_multiple %3, 256 : i32
    %5 = arith.index_cast %4 : i32 to index
    %c0 = arith.constant 0 : index
    %6 = vector.load %arg3[%5, %c0] : memref<256x32xbf16, #tpu.memory_space<vmem>>, vector<256x32xbf16>
    %c0_1 = arith.constant 0 : index
    %c0_2 = arith.constant 0 : index
    %7 = vector.load %arg7[%c0_1, %c0_2] : memref<256x32xf32, #tpu.memory_space<vmem>>, vector<256x32xf32>
    %c0_3 = arith.constant 0 : index
    %c0_4 = arith.constant 0 : index
    %8 = vector.load %arg2[%c0_3, %c0_4] : memref<256x256xbf16, #tpu.memory_space<vmem>>, vector<256x256xbf16>
    %cst = arith.constant dense<0.000000e+00> : vector<256x32xf32>
    %9 = tpu.matmul %8, %6, %cst {dimension_numbers = #tpu.dot_dimension_numbers<[1], [0], [0], [1], [0, 0, 1, 1], [], []>} : vector<256x256xbf16>, vector<256x32xbf16>, vector<256x32xf32> -> vector<256x32xf32>
    %10 = arith.addf %7, %9 : vector<256x32xf32>
    %c0_5 = arith.constant 0 : index
    %c0_6 = arith.constant 0 : index
    %11 = vector.load %arg7[%c0_5, %c0_6] : memref<256x32xf32, #tpu.memory_space<vmem>>, vector<256x32xf32>
    tpu.vector_store %arg7[%c0_5, %c0_6], %10 {strides = array<i32>} : memref<256x32xf32, #tpu.memory_space<vmem>>, vector<256x32xf32>,
    %c0_i32_7 = arith.constant 0 : i32
    %12 = arith.cmpi eq, %arg1, %c0_i32_7 : i32
    %13 = arith.extui %12 : i1 to i32
    %c0_i32_8 = arith.constant 0 : i32
    %14 = arith.cmpi ne, %13, %c0_i32_8 : i32
    scf.if %14 {
      %c0_9 = arith.constant 0 : index
      %c0_10 = arith.constant 0 : index
      %15 = vector.load %arg7[%c0_9, %c0_10] : memref<256x32xf32, #tpu.memory_space<vmem>>, vector<256x32xf32>
      %16 = arith.truncf %15 : vector<256x32xf32> to vector<256x32xbf16>
      %c0_11 = arith.constant 0 : index
      %c0_12 = arith.constant 0 : index
      %17 = vector.load %arg4[%c0_11, %c0_12] : memref<32x32xbf16, #tpu.memory_space<vmem>>, vector<32x32xbf16>
      %cst_13 = arith.constant dense<0.000000e+00> : vector<256x32xf32>
      %18 = tpu.matmul %16, %17, %cst_13 {dimension_numbers = #tpu.dot_dimension_numbers<[1], [0], [0], [1], [0, 0, 1, 1], [], []>} : vector<256x32xbf16>, vector<32x32xbf16>, vector<256x32xf32> -> vector<256x32xf32>
      %c0_14 = arith.constant 0 : index
      %c0_15 = arith.constant 0 : index
      %19 = vector.load %arg5[%c0_14, %c0_15] : memref<1x32xf32, #tpu.memory_space<vmem>>, vector<1x32xf32>
      %20 = vector.broadcast %19 : vector<1x32xf32> to vector<256x32xf32>
      %21 = arith.addf %18, %20 : vector<256x32xf32>
      %cst_16 = arith.constant 0.000000e+00 : f32
      %22 = vector.broadcast %cst_16 : f32 to vector<256x32xf32>
      %23 = arith.cmpf oge, %21, %22 : vector<256x32xf32>
      %cst_17 = arith.constant 0.00999999977 : f32
      %24 = vector.broadcast %cst_17 : f32 to vector<256x32xf32>
      %25 = arith.mulf %24, %21 : vector<256x32xf32>
      %26 = arith.select %23, %21, %25 : vector<256x32xi1>, vector<256x32xf32>
      %27 = arith.truncf %26 : vector<256x32xf32> to vector<256x32xbf16>
      %c0_18 = arith.constant 0 : index
      %c0_19 = arith.constant 0 : index
      %28 = vector.load %arg6[%c0_18, %c0_19] : memref<256x32xbf16, #tpu.memory_space<vmem>>, vector<256x32xbf16>
      tpu.vector_store %arg6[%c0_18, %c0_19], %27 {strides = array<i32>} : memref<256x32xbf16, #tpu.memory_space<vmem>>, vector<256x32xbf16>,
    } else {
    }
    return
  }
  func.func @transform_0(%arg0: i32, %arg1: i32) -> (i32, i32) {
    %c0_i32 = arith.constant 0 : i32
    return %arg0, %arg1 : i32, i32
  }
  func.func @transform_1(%arg0: i32, %arg1: i32) -> (i32, i32) {
    %c0_i32 = arith.constant 0 : i32
    %c0_i32_0 = arith.constant 0 : i32
    %c0_i32_1 = arith.constant 0 : i32
    return %c0_i32, %c0_i32_0 : i32, i32
  }
  func.func @transform_2(%arg0: i32, %arg1: i32) -> (i32, i32) {
    %c0_i32 = arith.constant 0 : i32
    %c0_i32_0 = arith.constant 0 : i32
    %c0_i32_1 = arith.constant 0 : i32
    return %c0_i32, %c0_i32_0 : i32, i32
  }
  func.func @transform_3(%arg0: i32, %arg1: i32) -> (i32, i32) {
    %c0_i32 = arith.constant 0 : i32
    %c0_i32_0 = arith.constant 0 : i32
    %c0_i32_1 = arith.constant 0 : i32
    return %c0_i32, %c0_i32_0 : i32, i32
  }
  func.func @transform_4(%arg0: i32, %arg1: i32) -> (i32, i32) {
    %c0_i32 = arith.constant 0 : i32
    %c0_i32_0 = arith.constant 0 : i32
    return %arg0, %c0_i32 : i32, i32
  }
}

</mosaic_0001>

<llo_original>
// kernel: tpu_custom_call.1
$region0: #{tpu_custom_call.1}
  #allocation0 [shape = 'u32[]', space=smem, size = 0x4, offset = 0x4, fixed_abs, tag = 'smem constant byte address 0x4 - core index']
  #allocation1 [shape = 'u32[144,128]{1,0:T(1,128)}', space=vmem, size = 0x12000, scoped, tag = 'internal scratch']
  #allocation2 [shape = 'f32[256,32]{1,0:T(8,128)}', space=vmem, size = 0x20000, scoped, tag = 'scratch operand']
  %s0 = inlined_call_operand.hbm [shape: bf16[256,256], index: 0, kind: input, shape index: {}]
  %s1 = inlined_call_operand.vmem [shape: bf16[256,32], index: 1, kind: input, shape index: {}]
  %s2 = inlined_call_operand.vmem [shape: bf16[32,32], index: 2, kind: input, shape index: {}]
  %s3 = inlined_call_operand.vmem [shape: f32[1,32], index: 3, kind: input, shape index: {}]
  %s4 = inlined_call_operand.vmem [shape: bf16[256,32], index: 4, kind: output, shape index: {}]
  %s5 = sld [smem:[#allocation0]]
  $region38: #{tpu_custom_call.1} parent=0
    _
  %s7 = ssub.s32 1, %s5
  %s8 = scalar_select 0, %s7, %s5
  $region1: #{tpu_custom_call.1} parent=0
    #allocation3 [shape = 'u8[131072]{0}', space=vmem, size = 0x20000, scoped, tag = 'input window, operand 0, single buffered']
    #allocation4 [shape = 's32[1]{0}', space=sflag, size = 0x4, scoped, tag = 'scoped memory for tpu_custom_call.1']
    %9 = vsyncpa [#allocation4], 0
    // Predicated region
    $region2: #{tpu_custom_call.1} parent=1 // pred_check
      _
    $region3: #{tpu_custom_call.1} parent=1 // pred_check_branch
      %11 = sbr.rel (0) target = $region5
    $region4: #{tpu_custom_call.1} parent=1 // pred_region
      %s13 = ssub.s32 4096, 4096
      %14 = vsyncadd [#allocation4], %s13
      %s15 = sshll.u32 [#allocation3], 4
      %s16 = int_to_ptr.vmem [resolvable:$true] %s15
      %21 = dma.hbm_to_vmem [thread:$0]  %s0, 4096, %s16, [#allocation4], 128, 128, 8
    $region5: #{tpu_custom_call.1} parent=1 // pred_fallthru
      _
    // Predicated region
    $region6: #{tpu_custom_call.1} parent=1 // pred_check
      _
    $region7: #{tpu_custom_call.1} parent=1 // pred_check_branch
      %23 = sbr.rel (0) target = $region9
    $region8: #{tpu_custom_call.1} parent=1 // pred_region
      _
    $region9: #{tpu_custom_call.1} parent=1 // pred_fallthru
      _
    // Predicated region
    $region10: #{tpu_custom_call.1} parent=1 // pred_check
      _
    $region11: #{tpu_custom_call.1} parent=1 // pred_check_branch
      %25 = sbr.rel (0) target = $region13
    $region12: #{tpu_custom_call.1} parent=1 // pred_region
      _
    $region13: #{tpu_custom_call.1} parent=1 // pred_fallthru
      _
    // Predicated region
    $region14: #{tpu_custom_call.1} parent=1 // pred_check
      _
    $region15: #{tpu_custom_call.1} parent=1 // pred_check_branch
      %27 = sbr.rel (0) target = $region17
    $region16: #{tpu_custom_call.1} parent=1 // pred_region
      _
    $region17: #{tpu_custom_call.1} parent=1 // pred_fallthru
      _
    // Predicated region
    $region18: #{tpu_custom_call.1} parent=1 // pred_check
      _
    $region19: #{tpu_custom_call.1} parent=1 // pred_check_branch
      %29 = sbr.rel (0) target = $region21
    $region20: #{tpu_custom_call.1} parent=1 // pred_region
      %30 = dma.done [#allocation4], 4096
    $region21: #{tpu_custom_call.1} parent=1 // pred_fallthru
      _
    %p32 = scmp.eq.s32.totalorder 0, 0
    // Predicated region
    $region22: #{tpu_custom_call.1} parent=1 // pred_check
      %p33 = pneg %p32
    $region23: #{tpu_custom_call.1} parent=1 // pred_check_branch
      %35 = sbr.rel (%p33) target = $region25
    $region24: #{tpu_custom_call.1} parent=1 // pred_region
      %vm36 = vcmask 261120
      %37 = vst.msk [vmem:[#allocation2] sm:$0xff] %vm36, 0.0
      %38 = vst.msk [vmem:[#allocation2 + $0x8] sm:$0xff] %vm36, 0.0
      %39 = vst.msk [vmem:[#allocation2 + $0x10] sm:$0xff] %vm36, 0.0
      %40 = vst.msk [vmem:[#allocation2 + $0x18] sm:$0xff] %vm36, 0.0
      %41 = vst.msk [vmem:[#allocation2 + $0x20] sm:$0xff] %vm36, 0.0
      %42 = vst.msk [vmem:[#allocation2 + $0x28] sm:$0xff] %vm36, 0.0
      %43 = vst.msk [vmem:[#allocation2 + $0x30] sm:$0xff] %vm36, 0.0
      %44 = vst.msk [vmem:[#allocation2 + $0x38] sm:$0xff] %vm36, 0.0
      %45 = vst.msk [vmem:[#allocation2 + $0x40] sm:$0xff] %vm36, 0.0
      %46 = vst.msk [vmem:[#allocation2 + $0x48] sm:$0xff] %vm36, 0.0
      %47 = vst.msk [vmem:[#allocation2 + $0x50] sm:$0xff] %vm36, 0.0
      %48 = vst.msk [vmem:[#allocation2 + $0x58] sm:$0xff] %vm36, 0.0
      %49 = vst.msk [vmem:[#allocation2 + $0x60] sm:$0xff] %vm36, 0.0
      %50 = vst.msk [vmem:[#allocation2 + $0x68] sm:$0xff] %vm36, 0.0
      %51 = vst.msk [vmem:[#allocation2 + $0x70] sm:$0xff] %vm36, 0.0
      %52 = vst.msk [vmem:[#allocation2 + $0x78] sm:$0xff] %vm36, 0.0
      %53 = vst.msk [vmem:[#allocation2 + $0x80] sm:$0xff] %vm36, 0.0
      %54 = vst.msk [vmem:[#allocation2 + $0x88] sm:$0xff] %vm36, 0.0
      %55 = vst.msk [vmem:[#allocation2 + $0x90] sm:$0xff] %vm36, 0.0
      %56 = vst.msk [vmem:[#allocation2 + $0x98] sm:$0xff] %vm36, 0.0
      %57 = vst.msk [vmem:[#allocation2 + $0xa0] sm:$0xff] %vm36, 0.0
      %58 = vst.msk [vmem:[#allocation2 + $0xa8] sm:$0xff] %vm36, 0.0
      %59 = vst.msk [vmem:[#allocation2 + $0xb0] sm:$0xff] %vm36, 0.0
      %60 = vst.msk [vmem:[#allocation2 + $0xb8] sm:$0xff] %vm36, 0.0
      %61 = vst.msk [vmem:[#allocation2 + $0xc0] sm:$0xff] %vm36, 0.0
      %62 = vst.msk [vmem:[#allocation2 + $0xc8] sm:$0xff] %vm36, 0.0
      %63 = vst.msk [vmem:[#allocation2 + $0xd0] sm:$0xff] %vm36, 0.0
      %64 = vst.msk [vmem:[#allocation2 + $0xd8] sm:$0xff] %vm36, 0.0
      %65 = vst.msk [vmem:[#allocation2 + $0xe0] sm:$0xff] %vm36, 0.0
      %66 = vst.msk [vmem:[#allocation2 + $0xe8] sm:$0xff] %vm36, 0.0
      %67 = vst.msk [vmem:[#allocation2 + $0xf0] sm:$0xff] %vm36, 0.0
      %68 = vst.msk [vmem:[#allocation2 + $0xf8] sm:$0xff] %vm36, 0.0
    $region25: #{tpu_custom_call.1} parent=1 // pred_fallthru
      _
    %s69 = smul.u32 0, 256
    %s70 = sshra.s32 %s69, 3
    %s71 = sand.u32 %s69, 7
    %s72 = smul.addr %s70, 4
    %s73 = scalar_lea.vmem %s1, %s72
    %v74 = vld [vmem:[%s73] sm:$0xf]
    %v75 = vld [vmem:[%s73 + $0x4] sm:$0xf]
    %v76 = vld [vmem:[%s73 + $0x8] sm:$0xf]
    %v77 = vld [vmem:[%s73 + $0xc] sm:$0xf]
    %v78 = vld [vmem:[%s73 + $0x10] sm:$0xf]
    %v79 = vld [vmem:[%s73 + $0x14] sm:$0xf]
    %v80 = vld [vmem:[%s73 + $0x18] sm:$0xf]
    %v81 = vld [vmem:[%s73 + $0x1c] sm:$0xf]
    %v82 = vld [vmem:[%s73 + $0x20] sm:$0xf]
    %v83 = vld [vmem:[%s73 + $0x24] sm:$0xf]
    %v84 = vld [vmem:[%s73 + $0x28] sm:$0xf]
    %v85 = vld [vmem:[%s73 + $0x2c] sm:$0xf]
    %v86 = vld [vmem:[%s73 + $0x30] sm:$0xf]
    %v87 = vld [vmem:[%s73 + $0x34] sm:$0xf]
    %v88 = vld [vmem:[%s73 + $0x38] sm:$0xf]
    %v89 = vld [vmem:[%s73 + $0x3c] sm:$0xf]
    %v90 = vld [vmem:[%s73 + $0x40] sm:$0xf]
    %v91 = vld [vmem:[%s73 + $0x44] sm:$0xf]
    %v92 = vld [vmem:[%s73 + $0x48] sm:$0xf]
    %v93 = vld [vmem:[%s73 + $0x4c] sm:$0xf]
    %v94 = vld [vmem:[%s73 + $0x50] sm:$0xf]
    %v95 = vld [vmem:[%s73 + $0x54] sm:$0xf]
    %v96 = vld [vmem:[%s73 + $0x58] sm:$0xf]
    %v97 = vld [vmem:[%s73 + $0x5c] sm:$0xf]
    %v98 = vld [vmem:[%s73 + $0x60] sm:$0xf]
    %v99 = vld [vmem:[%s73 + $0x64] sm:$0xf]
    %v100 = vld [vmem:[%s73 + $0x68] sm:$0xf]
    %v101 = vld [vmem:[%s73 + $0x6c] sm:$0xf]
    %v102 = vld [vmem:[%s73 + $0x70] sm:$0xf]
    %v103 = vld [vmem:[%s73 + $0x74] sm:$0xf]
    %v104 = vld [vmem:[%s73 + $0x78] sm:$0xf]
    %v105 = vld [vmem:[%s73 + $0x7c] sm:$0xf]
    %v106 = vld [vmem:[#allocation2] sm:$0xff]
    %v107 = vld [vmem:[#allocation2 + $0x8] sm:$0xff]
    %v108 = vld [vmem:[#allocation2 + $0x10] sm:$0xff]
    %v109 = vld [vmem:[#allocation2 + $0x18] sm:$0xff]
    %v110 = vld [vmem:[#allocation2 + $0x20] sm:$0xff]
    %v111 = vld [vmem:[#allocation2 + $0x28] sm:$0xff]
    %v112 = vld [vmem:[#allocation2 + $0x30] sm:$0xff]
    %v113 = vld [vmem:[#allocation2 + $0x38] sm:$0xff]
    %v114 = vld [vmem:[#allocation2 + $0x40] sm:$0xff]
    %v115 = vld [vmem:[#allocation2 + $0x48] sm:$0xff]
    %v116 = vld [vmem:[#allocation2 + $0x50] sm:$0xff]
    %v117 = vld [vmem:[#allocation2 + $0x58] sm:$0xff]
    %v118 = vld [vmem:[#allocation2 + $0x60] sm:$0xff]
    %v119 = vld [vmem:[#allocation2 + $0x68] sm:$0xff]
    %v120 = vld [vmem:[#allocation2 + $0x70] sm:$0xff]
    %v121 = vld [vmem:[#allocation2 + $0x78] sm:$0xff]
    %v122 = vld [vmem:[#allocation2 + $0x80] sm:$0xff]
    %v123 = vld [vmem:[#allocation2 + $0x88] sm:$0xff]
    %v124 = vld [vmem:[#allocation2 + $0x90] sm:$0xff]
    %v125 = vld [vmem:[#allocation2 + $0x98] sm:$0xff]
    %v126 = vld [vmem:[#allocation2 + $0xa0] sm:$0xff]
    %v127 = vld [vmem:[#allocation2 + $0xa8] sm:$0xff]
    %v128 = vld [vmem:[#allocation2 + $0xb0] sm:$0xff]
    %v129 = vld [vmem:[#allocation2 + $0xb8] sm:$0xff]
    %v130 = vld [vmem:[#allocation2 + $0xc0] sm:$0xff]
    %v131 = vld [vmem:[#allocation2 + $0xc8] sm:$0xff]
    %v132 = vld [vmem:[#allocation2 + $0xd0] sm:$0xff]
    %v133 = vld [vmem:[#allocation2 + $0xd8] sm:$0xff]
    %v134 = vld [vmem:[#allocation2 + $0xe0] sm:$0xff]
    %v135 = vld [vmem:[#allocation2 + $0xe8] sm:$0xff]
    %v136 = vld [vmem:[#allocation2 + $0xf0] sm:$0xff]
    %v137 = vld [vmem:[#allocation2 + $0xf8] sm:$0xff]
    %v138 = vld [vmem:[#allocation3] sm:$0xff]
    %v139 = vld [vmem:[#allocation3 + $0x8] sm:$0xff]
    %v140 = vld [vmem:[#allocation3 + $0x10] sm:$0xff]
    %v141 = vld [vmem:[#allocation3 + $0x18] sm:$0xff]
    %v142 = vld [vmem:[#allocation3 + $0x20] sm:$0xff]
    %v143 = vld [vmem:[#allocation3 + $0x28] sm:$0xff]
    %v144 = vld [vmem:[#allocation3 + $0x30] sm:$0xff]
    %v145 = vld [vmem:[#allocation3 + $0x38] sm:$0xff]
    %v146 = vld [vmem:[#allocation3 + $0x40] sm:$0xff]
    %v147 = vld [vmem:[#allocation3 + $0x48] sm:$0xff]
    %v148 = vld [vmem:[#allocation3 + $0x50] sm:$0xff]
    %v149 = vld [vmem:[#allocation3 + $0x58] sm:$0xff]
    %v150 = vld [vmem:[#allocation3 + $0x60] sm:$0xff]
    %v151 = vld [vmem:[#allocation3 + $0x68] sm:$0xff]
    %v152 = vld [vmem:[#allocation3 + $0x70] sm:$0xff]
    %v153 = vld [vmem:[#allocation3 + $0x78] sm:$0xff]
    %v154 = vld [vmem:[#allocation3 + $0x80] sm:$0xff]
    %v155 = vld [vmem:[#allocation3 + $0x88] sm:$0xff]
    %v156 = vld [vmem:[#allocation3 + $0x90] sm:$0xff]
    %v157 = vld [vmem:[#allocation3 + $0x98] sm:$0xff]
    %v158 = vld [vmem:[#allocation3 + $0xa0] sm:$0xff]
    %v159 = vld [vmem:[#allocation3 + $0xa8] sm:$0xff]
    %v160 = vld [vmem:[#allocation3 + $0xb0] sm:$0xff]
    %v161 = vld [vmem:[#allocation3 + $0xb8] sm:$0xff]
    %v162 = vld [vmem:[#allocation3 + $0xc0] sm:$0xff]
    %v163 = vld [vmem:[#allocation3 + $0xc8] sm:$0xff]
    %v164 = vld [vmem:[#allocation3 + $0xd0] sm:$0xff]
    %v165 = vld [vmem:[#allocation3 + $0xd8] sm:$0xff]
    %v166 = vld [vmem:[#allocation3 + $0xe0] sm:$0xff]
    %v167 = vld [vmem:[#allocation3 + $0xe8] sm:$0xff]
    %v168 = vld [vmem:[#allocation3 + $0xf0] sm:$0xff]
    %v169 = vld [vmem:[#allocation3 + $0xf8] sm:$0xff]
    %v202 = vunpack.c.l.b16 %v138
    %v203 = vunpack.c.h.b16 %v138
    %v204 = vunpack.c.l.b16 %v139
    %v205 = vunpack.c.h.b16 %v139
    %v206 = vunpack.c.l.b16 %v140
    %v207 = vunpack.c.h.b16 %v140
    %v208 = vunpack.c.l.b16 %v141
    %v209 = vunpack.c.h.b16 %v141
    %v210 = vunpack.c.l.b16 %v142
    %v211 = vunpack.c.h.b16 %v142
    %v212 = vunpack.c.l.b16 %v143
    %v213 = vunpack.c.h.b16 %v143
    %v214 = vunpack.c.l.b16 %v144
    %v215 = vunpack.c.h.b16 %v144
    %v216 = vunpack.c.l.b16 %v145
    %v217 = vunpack.c.h.b16 %v145
    %v218 = vunpack.c.l.b16 %v146
    %v219 = vunpack.c.h.b16 %v146
    %v220 = vunpack.c.l.b16 %v147
    %v221 = vunpack.c.h.b16 %v147
    %v222 = vunpack.c.l.b16 %v148
    %v223 = vunpack.c.h.b16 %v148
    %v224 = vunpack.c.l.b16 %v149
    %v225 = vunpack.c.h.b16 %v149
    %v226 = vunpack.c.l.b16 %v150
    %v227 = vunpack.c.h.b16 %v150
    %v228 = vunpack.c.l.b16 %v151
    %v229 = vunpack.c.h.b16 %v151
    %v230 = vunpack.c.l.b16 %v152
    %v231 = vunpack.c.h.b16 %v152
    %v232 = vunpack.c.l.b16 %v153
    %v233 = vunpack.c.h.b16 %v153
    %v234 = vunpack.c.l.b16 %v154
    %v235 = vunpack.c.h.b16 %v154
    %v236 = vunpack.c.l.b16 %v155
    %v237 = vunpack.c.h.b16 %v155
    %v238 = vunpack.c.l.b16 %v156
    %v239 = vunpack.c.h.b16 %v156
    %v240 = vunpack.c.l.b16 %v157
    %v241 = vunpack.c.h.b16 %v157
    %v242 = vunpack.c.l.b16 %v158
    %v243 = vunpack.c.h.b16 %v158
    %v244 = vunpack.c.l.b16 %v159
    %v245 = vunpack.c.h.b16 %v159
    %v246 = vunpack.c.l.b16 %v160
    %v247 = vunpack.c.h.b16 %v160
    %v248 = vunpack.c.l.b16 %v161
    %v249 = vunpack.c.h.b16 %v161
    %v250 = vunpack.c.l.b16 %v162
    %v251 = vunpack.c.h.b16 %v162
    %v252 = vunpack.c.l.b16 %v163
    %v253 = vunpack.c.h.b16 %v163
    %v254 = vunpack.c.l.b16 %v164
    %v255 = vunpack.c.h.b16 %v164
    %v256 = vunpack.c.l.b16 %v165
    %v257 = vunpack.c.h.b16 %v165
    %v258 = vunpack.c.l.b16 %v166
    %v259 = vunpack.c.h.b16 %v166
    %v260 = vunpack.c.l.b16 %v167
    %v261 = vunpack.c.h.b16 %v167
    %v262 = vunpack.c.l.b16 %v168
    %v263 = vunpack.c.h.b16 %v168
    %v264 = vunpack.c.l.b16 %v169
    %v265 = vunpack.c.h.b16 %v169
    %v266 = vpack.c.b16 %v204, %v202
    %v267 = vpack.c.b16 %v205, %v203
    %v268 = vpack.c.b16 %v208, %v206
    %v269 = vpack.c.b16 %v209, %v207
    %v270 = vpack.c.b16 %v212, %v210
    %v271 = vpack.c.b16 %v213, %v211
    %v272 = vpack.c.b16 %v216, %v214
    %v273 = vpack.c.b16 %v217, %v215
    %v274 = vpack.c.b16 %v220, %v218
    %v275 = vpack.c.b16 %v221, %v219
    %v276 = vpack.c.b16 %v224, %v222
    %v277 = vpack.c.b16 %v225, %v223
    %v278 = vpack.c.b16 %v228, %v226
    %v279 = vpack.c.b16 %v229, %v227
    %v280 = vpack.c.b16 %v232, %v230
    %v281 = vpack.c.b16 %v233, %v231
    %v282 = vpack.c.b16 %v236, %v234
    %v283 = vpack.c.b16 %v237, %v235
    %v284 = vpack.c.b16 %v240, %v238
    %v285 = vpack.c.b16 %v241, %v239
    %v286 = vpack.c.b16 %v244, %v242
    %v287 = vpack.c.b16 %v245, %v243
    %v288 = vpack.c.b16 %v248, %v246
    %v289 = vpack.c.b16 %v249, %v247
    %v290 = vpack.c.b16 %v252, %v250
    %v291 = vpack.c.b16 %v253, %v251
    %v292 = vpack.c.b16 %v256, %v254
    %v293 = vpack.c.b16 %v257, %v255
    %v294 = vpack.c.b16 %v260, %v258
    %v295 = vpack.c.b16 %v261, %v259
    %v296 = vpack.c.b16 %v264, %v262
    %v297 = vpack.c.b16 %v265, %v263
    %v362 = vunpack.c.l.b16 %v74
    %v363 = vunpack.c.l.b16 %v75
    %v364 = vunpack.c.l.b16 %v76
    %v365 = vunpack.c.l.b16 %v77
    %v366 = vunpack.c.l.b16 %v78
    %v367 = vunpack.c.l.b16 %v79
    %v368 = vunpack.c.l.b16 %v80
    %v369 = vunpack.c.l.b16 %v81
    %v370 = vunpack.c.l.b16 %v82
    %v371 = vunpack.c.l.b16 %v83
    %v372 = vunpack.c.l.b16 %v84
    %v373 = vunpack.c.l.b16 %v85
    %v374 = vunpack.c.l.b16 %v86
    %v375 = vunpack.c.l.b16 %v87
    %v376 = vunpack.c.l.b16 %v88
    %v377 = vunpack.c.l.b16 %v89
    %v378 = vunpack.c.l.b16 %v90
    %v379 = vunpack.c.l.b16 %v91
    %v380 = vunpack.c.l.b16 %v92
    %v381 = vunpack.c.l.b16 %v93
    %v382 = vunpack.c.l.b16 %v94
    %v383 = vunpack.c.l.b16 %v95
    %v384 = vunpack.c.l.b16 %v96
    %v385 = vunpack.c.l.b16 %v97
    %v386 = vunpack.c.l.b16 %v98
    %v387 = vunpack.c.l.b16 %v99
    %v388 = vunpack.c.l.b16 %v100
    %v389 = vunpack.c.l.b16 %v101
    %v390 = vunpack.c.l.b16 %v102
    %v391 = vunpack.c.l.b16 %v103
    %v392 = vunpack.c.l.b16 %v104
    %v393 = vunpack.c.l.b16 %v105
    %v394 = vpack.c.b16 %v363, %v362
    %v395 = vpack.c.b16 %v365, %v364
    %v396 = vpack.c.b16 %v367, %v366
    %v397 = vpack.c.b16 %v369, %v368
    %v398 = vpack.c.b16 %v371, %v370
    %v399 = vpack.c.b16 %v373, %v372
    %v400 = vpack.c.b16 %v375, %v374
    %v401 = vpack.c.b16 %v377, %v376
    %v402 = vpack.c.b16 %v379, %v378
    %v403 = vpack.c.b16 %v381, %v380
    %v404 = vpack.c.b16 %v383, %v382
    %v405 = vpack.c.b16 %v385, %v384
    %v406 = vpack.c.b16 %v387, %v386
    %v407 = vpack.c.b16 %v389, %v388
    %v408 = vpack.c.b16 %v391, %v390
    %v409 = vpack.c.b16 %v393, %v392
    %426 = vmatprep.subr.bf16.mxu0 0
    %427 = vmatpush1.bf16.msra.mxu0 %v394
    %428 = vmatprep.subr.bf16.mxu0 0
    %429 = vmatpush1.bf16.msra.mxu0 %v395
    %430 = vmatprep.subr.bf16.mxu0 0
    %431 = vmatpush1.bf16.msra.mxu0 %v396
    %432 = vmatprep.subr.bf16.mxu0 0
    %433 = vmatpush1.bf16.msra.mxu0 %v397
    %434 = vmatprep.subr.bf16.mxu0 0
    %435 = vmatpush1.bf16.msra.mxu0 %v398
    %436 = vmatprep.subr.bf16.mxu0 0
    %437 = vmatpush1.bf16.msra.mxu0 %v399
    %438 = vmatprep.subr.bf16.mxu0 0
    %439 = vmatpush1.bf16.msra.mxu0 %v400
    %440 = vmatprep.subr.bf16.mxu0 0
    %441 = vmatpush1.bf16.msra.mxu0 %v401
    %442 = vmatprep.subr.bf16.mxu0 0
    %443 = vmatpush1.bf16.msra.mxu0 %v402
    %444 = vmatprep.subr.bf16.mxu0 0
    %445 = vmatpush1.bf16.msra.mxu0 %v403
    %446 = vmatprep.subr.bf16.mxu0 0
    %447 = vmatpush1.bf16.msra.mxu0 %v404
    %448 = vmatprep.subr.bf16.mxu0 0
    %449 = vmatpush1.bf16.msra.mxu0 %v405
    %450 = vmatprep.subr.bf16.mxu0 0
    %451 = vmatpush1.bf16.msra.mxu0 %v406
    %452 = vmatprep.subr.bf16.mxu0 0
    %453 = vmatpush1.bf16.msra.mxu0 %v407
    %454 = vmatprep.subr.bf16.mxu0 0
    %455 = vmatpush1.bf16.msra.mxu0 %v408
    %456 = vmatprep.subr.bf16.mxu0 0
    %457 = vmatpush1.bf16.msra.mxu0 %v409
    %458 = vmatprep.mubr.bf16.mxu0 %v267
    %459 = vmatmul.mubr.bf16.gmra.mrb[0].mxu0 %v266
    %v460 = vpop.f32.mrb[0].mxu0
    %v461 = vadd.f32 0.0, %v460
    %v462 = vpop.f32.mrb[0].mxu0
    %v463 = vpop.f32.mrb[0].mxu0
    %v464 = vadd.f32 0.0, %v463
    %v465 = vpop.f32.mrb[0].mxu0
    %466 = vmatprep.mubr.bf16.mxu0 %v269
    %467 = vmatmul.mubr.bf16.gmra.mrb[0].mxu0 %v268
    %v468 = vpop.f32.mrb[0].mxu0
    %v469 = vadd.f32 0.0, %v468
    %v470 = vpop.f32.mrb[0].mxu0
    %v471 = vpop.f32.mrb[0].mxu0
    %v472 = vadd.f32 0.0, %v471
    %v473 = vpop.f32.mrb[0].mxu0
    %474 = vmatprep.mubr.bf16.mxu0 %v271
    %475 = vmatmul.mubr.bf16.gmra.mrb[0].mxu0 %v270
    %v476 = vpop.f32.mrb[0].mxu0
    %v477 = vadd.f32 0.0, %v476
    %v478 = vpop.f32.mrb[0].mxu0
    %v479 = vpop.f32.mrb[0].mxu0
    %v480 = vadd.f32 0.0, %v479
    %v481 = vpop.f32.mrb[0].mxu0
    %482 = vmatprep.mubr.bf16.mxu0 %v273
    %483 = vmatmul.mubr.bf16.gmra.mrb[0].mxu0 %v272
    %v484 = vpop.f32.mrb[0].mxu0
    %v485 = vadd.f32 0.0, %v484
    %v486 = vpop.f32.mrb[0].mxu0
    %v487 = vpop.f32.mrb[0].mxu0
    %v488 = vadd.f32 0.0, %v487
    %v489 = vpop.f32.mrb[0].mxu0
    %490 = vmatprep.mubr.bf16.mxu0 %v275
    %491 = vmatmul.mubr.bf16.gmra.mrb[0].mxu0 %v274
    %v492 = vpop.f32.mrb[0].mxu0
    %v493 = vadd.f32 0.0, %v492
    %v494 = vpop.f32.mrb[0].mxu0
    %v495 = vpop.f32.mrb[0].mxu0
    %v496 = vadd.f32 0.0, %v495
    %v497 = vpop.f32.mrb[0].mxu0
    %498 = vmatprep.mubr.bf16.mxu0 %v277
    %499 = vmatmul.mubr.bf16.gmra.mrb[0].mxu0 %v276
    %v500 = vpop.f32.mrb[0].mxu0
    %v501 = vadd.f32 0.0, %v500
    %v502 = vpop.f32.mrb[0].mxu0
    %v503 = vpop.f32.mrb[0].mxu0
    %v504 = vadd.f32 0.0, %v503
    %v505 = vpop.f32.mrb[0].mxu0
    %506 = vmatprep.mubr.bf16.mxu0 %v279
    %507 = vmatmul.mubr.bf16.gmra.mrb[0].mxu0 %v278
    %v508 = vpop.f32.mrb[0].mxu0
    %v509 = vadd.f32 0.0, %v508
    %v510 = vpop.f32.mrb[0].mxu0
    %v511 = vpop.f32.mrb[0].mxu0
    %v512 = vadd.f32 0.0, %v511
    %v513 = vpop.f32.mrb[0].mxu0
    %514 = vmatprep.mubr.bf16.mxu0 %v281
    %515 = vmatmul.mubr.bf16.gmra.mrb[0].mxu0 %v280
    %v516 = vpop.f32.mrb[0].mxu0
    %v517 = vadd.f32 0.0, %v516
    %v518 = vpop.f32.mrb[0].mxu0
    %v519 = vpop.f32.mrb[0].mxu0
    %v520 = vadd.f32 0.0, %v519
    %v521 = vpop.f32.mrb[0].mxu0
    %522 = vmatprep.mubr.bf16.mxu0 %v283
    %523 = vmatmul.mubr.bf16.gmra.mrb[0].mxu0 %v282
    %v524 = vpop.f32.mrb[0].mxu0
    %v525 = vadd.f32 0.0, %v524
    %v526 = vpop.f32.mrb[0].mxu0
    %v527 = vpop.f32.mrb[0].mxu0
    %v528 = vadd.f32 0.0, %v527
    %v529 = vpop.f32.mrb[0].mxu0
    %530 = vmatprep.mubr.bf16.mxu0 %v285
    %531 = vmatmul.mubr.bf16.gmra.mrb[0].mxu0 %v284
    %v532 = vpop.f32.mrb[0].mxu0
    %v533 = vadd.f32 0.0, %v532
    %v534 = vpop.f32.mrb[0].mxu0
    %v535 = vpop.f32.mrb[0].mxu0
    %v536 = vadd.f32 0.0, %v535
    %v537 = vpop.f32.mrb[0].mxu0
    %538 = vmatprep.mubr.bf16.mxu0 %v287
    %539 = vmatmul.mubr.bf16.gmra.mrb[0].mxu0 %v286
    %v540 = vpop.f32.mrb[0].mxu0
    %v541 = vadd.f32 0.0, %v540
    %v542 = vpop.f32.mrb[0].mxu0
    %v543 = vpop.f32.mrb[0].mxu0
    %v544 = vadd.f32 0.0, %v543
    %v545 = vpop.f32.mrb[0].mxu0
    %546 = vmatprep.mubr.bf16.mxu0 %v289
    %547 = vmatmul.mubr.bf16.gmra.mrb[0].mxu0 %v288
    %v548 = vpop.f32.mrb[0].mxu0
    %v549 = vadd.f32 0.0, %v548
    %v550 = vpop.f32.mrb[0].mxu0
    %v551 = vpop.f32.mrb[0].mxu0
    %v552 = vadd.f32 0.0, %v551
    %v553 = vpop.f32.mrb[0].mxu0
    %554 = vmatprep.mubr.bf16.mxu0 %v291
    %555 = vmatmul.mubr.bf16.gmra.mrb[0].mxu0 %v290
    %v556 = vpop.f32.mrb[0].mxu0
    %v557 = vadd.f32 0.0, %v556
    %v558 = vpop.f32.mrb[0].mxu0
    %v559 = vpop.f32.mrb[0].mxu0
    %v560 = vadd.f32 0.0, %v559
    %v561 = vpop.f32.mrb[0].mxu0
    %562 = vmatprep.mubr.bf16.mxu0 %v293
    %563 = vmatmul.mubr.bf16.gmra.mrb[0].mxu0 %v292
    %v564 = vpop.f32.mrb[0].mxu0
    %v565 = vadd.f32 0.0, %v564
    %v566 = vpop.f32.mrb[0].mxu0
    %v567 = vpop.f32.mrb[0].mxu0
    %v568 = vadd.f32 0.0, %v567
    %v569 = vpop.f32.mrb[0].mxu0
    %570 = vmatprep.mubr.bf16.mxu0 %v295
    %571 = vmatmul.mubr.bf16.gmra.mrb[0].mxu0 %v294
    %v572 = vpop.f32.mrb[0].mxu0
    %v573 = vadd.f32 0.0, %v572
    %v574 = vpop.f32.mrb[0].mxu0
    %v575 = vpop.f32.mrb[0].mxu0
    %v576 = vadd.f32 0.0, %v575
    %v577 = vpop.f32.mrb[0].mxu0
    %578 = vmatprep.mubr.bf16.mxu0 %v297
    %579 = vmatmul.mubr.bf16.gmra.mrb[0].mxu0 %v296
    %v580 = vpop.f32.mrb[0].mxu0
    %v581 = vadd.f32 0.0, %v580
    %v582 = vpop.f32.mrb[0].mxu0
    %v583 = vpop.f32.mrb[0].mxu0
    %v584 = vadd.f32 0.0, %v583
    %v585 = vpop.f32.mrb[0].mxu0
    %586 = vdwg.mxu0
    %v587 = vadd.f32 %v106, %v461
    %v588 = vadd.f32 %v107, %v464
    %v589 = vadd.f32 %v108, %v469
    %v590 = vadd.f32 %v109, %v472
    %v591 = vadd.f32 %v110, %v477
    %v592 = vadd.f32 %v111, %v480
    %v593 = vadd.f32 %v112, %v485
    %v594 = vadd.f32 %v113, %v488
    %v595 = vadd.f32 %v114, %v493
    %v596 = vadd.f32 %v115, %v496
    %v597 = vadd.f32 %v116, %v501
    %v598 = vadd.f32 %v117, %v504
    %v599 = vadd.f32 %v118, %v509
    %v600 = vadd.f32 %v119, %v512
    %v601 = vadd.f32 %v120, %v517
    %v602 = vadd.f32 %v121, %v520
    %v603 = vadd.f32 %v122, %v525
    %v604 = vadd.f32 %v123, %v528
    %v605 = vadd.f32 %v124, %v533
    %v606 = vadd.f32 %v125, %v536
    %v607 = vadd.f32 %v126, %v541
    %v608 = vadd.f32 %v127, %v544
    %v609 = vadd.f32 %v128, %v549
    %v610 = vadd.f32 %v129, %v552
    %v611 = vadd.f32 %v130, %v557
    %v612 = vadd.f32 %v131, %v560
    %v613 = vadd.f32 %v132, %v565
    %v614 = vadd.f32 %v133, %v568
    %v615 = vadd.f32 %v134, %v573
    %v616 = vadd.f32 %v135, %v576
    %v617 = vadd.f32 %v136, %v581
    %v618 = vadd.f32 %v137, %v584
    %vm619 = vcmask 261120
    %620 = vst.msk [vmem:[#allocation2] sm:$0xff] %vm619, %v587
    %621 = vst.msk [vmem:[#allocation2 + $0x8] sm:$0xff] %vm619, %v588
    %622 = vst.msk [vmem:[#allocation2 + $0x10] sm:$0xff] %vm619, %v589
    %623 = vst.msk [vmem:[#allocation2 + $0x18] sm:$0xff] %vm619, %v590
    %624 = vst.msk [vmem:[#allocation2 + $0x20] sm:$0xff] %vm619, %v591
    %625 = vst.msk [vmem:[#allocation2 + $0x28] sm:$0xff] %vm619, %v592
    %626 = vst.msk [vmem:[#allocation2 + $0x30] sm:$0xff] %vm619, %v593
    %627 = vst.msk [vmem:[#allocation2 + $0x38] sm:$0xff] %vm619, %v594
    %628 = vst.msk [vmem:[#allocation2 + $0x40] sm:$0xff] %vm619, %v595
    %629 = vst.msk [vmem:[#allocation2 + $0x48] sm:$0xff] %vm619, %v596
    %630 = vst.msk [vmem:[#allocation2 + $0x50] sm:$0xff] %vm619, %v597
    %631 = vst.msk [vmem:[#allocation2 + $0x58] sm:$0xff] %vm619, %v598
    %632 = vst.msk [vmem:[#allocation2 + $0x60] sm:$0xff] %vm619, %v599
    %633 = vst.msk [vmem:[#allocation2 + $0x68] sm:$0xff] %vm619, %v600
    %634 = vst.msk [vmem:[#allocation2 + $0x70] sm:$0xff] %vm619, %v601
    %635 = vst.msk [vmem:[#allocation2 + $0x78] sm:$0xff] %vm619, %v602
    %636 = vst.msk [vmem:[#allocation2 + $0x80] sm:$0xff] %vm619, %v603
    %637 = vst.msk [vmem:[#allocation2 + $0x88] sm:$0xff] %vm619, %v604
    %638 = vst.msk [vmem:[#allocation2 + $0x90] sm:$0xff] %vm619, %v605
    %639 = vst.msk [vmem:[#allocation2 + $0x98] sm:$0xff] %vm619, %v606
    %640 = vst.msk [vmem:[#allocation2 + $0xa0] sm:$0xff] %vm619, %v607
    %641 = vst.msk [vmem:[#allocation2 + $0xa8] sm:$0xff] %vm619, %v608
    %642 = vst.msk [vmem:[#allocation2 + $0xb0] sm:$0xff] %vm619, %v609
    %643 = vst.msk [vmem:[#allocation2 + $0xb8] sm:$0xff] %vm619, %v610
    %644 = vst.msk [vmem:[#allocation2 + $0xc0] sm:$0xff] %vm619, %v611
    %645 = vst.msk [vmem:[#allocation2 + $0xc8] sm:$0xff] %vm619, %v612
    %646 = vst.msk [vmem:[#allocation2 + $0xd0] sm:$0xff] %vm619, %v613
    %647 = vst.msk [vmem:[#allocation2 + $0xd8] sm:$0xff] %vm619, %v614
    %648 = vst.msk [vmem:[#allocation2 + $0xe0] sm:$0xff] %vm619, %v615
    %649 = vst.msk [vmem:[#allocation2 + $0xe8] sm:$0xff] %vm619, %v616
    %650 = vst.msk [vmem:[#allocation2 + $0xf0] sm:$0xff] %vm619, %v617
    %651 = vst.msk [vmem:[#allocation2 + $0xf8] sm:$0xff] %vm619, %v618
    // Predicated region
    $region26: #{tpu_custom_call.1} parent=1 // pred_check
      %p652 = pneg %p32
    $region27: #{tpu_custom_call.1} parent=1 // pred_check_branch
      %654 = sbr.rel (%p652) target = $region29
    $region28: #{tpu_custom_call.1} parent=1 // pred_region
      %v655 = vld [vmem:[#allocation2] sm:$0xff]
      %v656 = vld [vmem:[#allocation2 + $0x8] sm:$0xff]
      %v657 = vld [vmem:[#allocation2 + $0x10] sm:$0xff]
      %v658 = vld [vmem:[#allocation2 + $0x18] sm:$0xff]
      %v659 = vld [vmem:[#allocation2 + $0x20] sm:$0xff]
      %v660 = vld [vmem:[#allocation2 + $0x28] sm:$0xff]
      %v661 = vld [vmem:[#allocation2 + $0x30] sm:$0xff]
      %v662 = vld [vmem:[#allocation2 + $0x38] sm:$0xff]
      %v663 = vld [vmem:[#allocation2 + $0x40] sm:$0xff]
      %v664 = vld [vmem:[#allocation2 + $0x48] sm:$0xff]
      %v665 = vld [vmem:[#allocation2 + $0x50] sm:$0xff]
      %v666 = vld [vmem:[#allocation2 + $0x58] sm:$0xff]
      %v667 = vld [vmem:[#allocation2 + $0x60] sm:$0xff]
      %v668 = vld [vmem:[#allocation2 + $0x68] sm:$0xff]
      %v669 = vld [vmem:[#allocation2 + $0x70] sm:$0xff]
      %v670 = vld [vmem:[#allocation2 + $0x78] sm:$0xff]
      %v671 = vld [vmem:[#allocation2 + $0x80] sm:$0xff]
      %v672 = vld [vmem:[#allocation2 + $0x88] sm:$0xff]
      %v673 = vld [vmem:[#allocation2 + $0x90] sm:$0xff]
      %v674 = vld [vmem:[#allocation2 + $0x98] sm:$0xff]
      %v675 = vld [vmem:[#allocation2 + $0xa0] sm:$0xff]
      %v676 = vld [vmem:[#allocation2 + $0xa8] sm:$0xff]
      %v677 = vld [vmem:[#allocation2 + $0xb0] sm:$0xff]
      %v678 = vld [vmem:[#allocation2 + $0xb8] sm:$0xff]
      %v679 = vld [vmem:[#allocation2 + $0xc0] sm:$0xff]
      %v680 = vld [vmem:[#allocation2 + $0xc8] sm:$0xff]
      %v681 = vld [vmem:[#allocation2 + $0xd0] sm:$0xff]
      %v682 = vld [vmem:[#allocation2 + $0xd8] sm:$0xff]
      %v683 = vld [vmem:[#allocation2 + $0xe0] sm:$0xff]
      %v684 = vld [vmem:[#allocation2 + $0xe8] sm:$0xff]
      %v685 = vld [vmem:[#allocation2 + $0xf0] sm:$0xff]
      %v686 = vld [vmem:[#allocation2 + $0xf8] sm:$0xff]
      %v687 = vpack.c.bf16 %v656, %v655
      %v688 = vpack.c.bf16 %v658, %v657
      %v689 = vpack.c.bf16 %v660, %v659
      %v690 = vpack.c.bf16 %v662, %v661
      %v691 = vpack.c.bf16 %v664, %v663
      %v692 = vpack.c.bf16 %v666, %v665
      %v693 = vpack.c.bf16 %v668, %v667
      %v694 = vpack.c.bf16 %v670, %v669
      %v695 = vpack.c.bf16 %v672, %v671
      %v696 = vpack.c.bf16 %v674, %v673
      %v697 = vpack.c.bf16 %v676, %v675
      %v698 = vpack.c.bf16 %v678, %v677
      %v699 = vpack.c.bf16 %v680, %v679
      %v700 = vpack.c.bf16 %v682, %v681
      %v701 = vpack.c.bf16 %v684, %v683
      %v702 = vpack.c.bf16 %v686, %v685
      %v703 = vld [vmem:[%s2] sm:$0xf]
      %v704 = vld [vmem:[%s2 + $0x4] sm:$0xf]
      %v705 = vld [vmem:[%s2 + $0x8] sm:$0xf]
      %v706 = vld [vmem:[%s2 + $0xc] sm:$0xf]
      %v707 = vld [vmem:[%s3] sm:$0x1]
      %v709 = vlaneseq
      %v710 = vshrl.u32 %v709, 7
      %v711 = vsub.s32 0, %v710
      %v712 = vrot.slane %v707, %v711
      %v718 = vunpack.c.l.b16 %v703
      %v719 = vunpack.c.l.b16 %v704
      %v720 = vunpack.c.l.b16 %v705
      %v721 = vunpack.c.l.b16 %v706
      %v722 = vpack.c.b16 %v719, %v718
      %v723 = vpack.c.b16 %v721, %v720
      %v727 = vsel %vm619, %v687, 0
      %v730 = vsel %vm619, %v688, 0
      %v733 = vsel %vm619, %v689, 0
      %v736 = vsel %vm619, %v690, 0
      %v739 = vsel %vm619, %v691, 0
      %v742 = vsel %vm619, %v692, 0
      %v745 = vsel %vm619, %v693, 0
      %v748 = vsel %vm619, %v694, 0
      %v751 = vsel %vm619, %v695, 0
      %v754 = vsel %vm619, %v696, 0
      %v757 = vsel %vm619, %v697, 0
      %v760 = vsel %vm619, %v698, 0
      %v763 = vsel %vm619, %v699, 0
      %v766 = vsel %vm619, %v700, 0
      %v769 = vsel %vm619, %v701, 0
      %v772 = vsel %vm619, %v702, 0
      %774 = vmatprep.subr.bf16.mxu0 0
      %775 = vmatpush1.bf16.msra.mxu0 %v722
      %776 = vmatprep.subr.bf16.mxu0 0
      %777 = vmatpush1.bf16.msra.mxu0 %v723
      %778 = vmatprep.subr.bf16.mxu0 0
      %779 = vmatpush1.bf16.msra.mxu0 0
      %780 = vmatprep.subr.bf16.mxu0 0
      %781 = vmatpush1.bf16.msra.mxu0 0
      %782 = vmatprep.subr.bf16.mxu0 0
      %783 = vmatpush1.bf16.msra.mxu0 0
      %784 = vmatprep.subr.bf16.mxu0 0
      %785 = vmatpush1.bf16.msra.mxu0 0
      %786 = vmatprep.subr.bf16.mxu0 0
      %787 = vmatpush1.bf16.msra.mxu0 0
      %788 = vmatprep.subr.bf16.mxu0 0
      %789 = vmatpush1.bf16.msra.mxu0 0
      %790 = vmatprep.subr.bf16.mxu0 0
      %791 = vmatpush1.bf16.msra.mxu0 0
      %792 = vmatprep.subr.bf16.mxu0 0
      %793 = vmatpush1.bf16.msra.mxu0 0
      %794 = vmatprep.subr.bf16.mxu0 0
      %795 = vmatpush1.bf16.msra.mxu0 0
      %796 = vmatprep.subr.bf16.mxu0 0
      %797 = vmatpush1.bf16.msra.mxu0 0
      %798 = vmatprep.subr.bf16.mxu0 0
      %799 = vmatpush1.bf16.msra.mxu0 0
      %800 = vmatprep.subr.bf16.mxu0 0
      %801 = vmatpush1.bf16.msra.mxu0 0
      %802 = vmatprep.subr.bf16.mxu0 0
      %803 = vmatpush1.bf16.msra.mxu0 0
      %804 = vmatprep.subr.bf16.mxu0 0
      %805 = vmatpush1.bf16.msra.mxu0 0
      %806 = vmatprep.mubr.bf16.mxu0 0
      %807 = vmatmul.mubr.bf16.gmra.mrb[0].mxu0 %v727
      %v808 = vpop.f32.mrb[0].mxu0
      %v809 = vadd.f32 %v712, %v808
      %v810 = vpop.f32.mrb[0].mxu0
      %v811 = vpop.f32.mrb[0].mxu0
      %v812 = vadd.f32 %v712, %v811
      %v813 = vpop.f32.mrb[0].mxu0
      %814 = vmatprep.mubr.bf16.mxu0 0
      %815 = vmatmul.mubr.bf16.gmra.mrb[0].mxu0 %v730
      %v816 = vpop.f32.mrb[0].mxu0
      %v817 = vadd.f32 %v712, %v816
      %v818 = vpop.f32.mrb[0].mxu0
      %v819 = vpop.f32.mrb[0].mxu0
      %v820 = vadd.f32 %v712, %v819
      %v821 = vpop.f32.mrb[0].mxu0
      %822 = vmatprep.mubr.bf16.mxu0 0
      %823 = vmatmul.mubr.bf16.gmra.mrb[0].mxu0 %v733
      %v824 = vpop.f32.mrb[0].mxu0
      %v825 = vadd.f32 %v712, %v824
      %v826 = vpop.f32.mrb[0].mxu0
      %v827 = vpop.f32.mrb[0].mxu0
      %v828 = vadd.f32 %v712, %v827
      %v829 = vpop.f32.mrb[0].mxu0
      %830 = vmatprep.mubr.bf16.mxu0 0
      %831 = vmatmul.mubr.bf16.gmra.mrb[0].mxu0 %v736
      %v832 = vpop.f32.mrb[0].mxu0
      %v833 = vadd.f32 %v712, %v832
      %v834 = vpop.f32.mrb[0].mxu0
      %v835 = vpop.f32.mrb[0].mxu0
      %v836 = vadd.f32 %v712, %v835
      %v837 = vpop.f32.mrb[0].mxu0
      %838 = vmatprep.mubr.bf16.mxu0 0
      %839 = vmatmul.mubr.bf16.gmra.mrb[0].mxu0 %v739
      %v840 = vpop.f32.mrb[0].mxu0
      %v841 = vadd.f32 %v712, %v840
      %v842 = vpop.f32.mrb[0].mxu0
      %v843 = vpop.f32.mrb[0].mxu0
      %v844 = vadd.f32 %v712, %v843
      %v845 = vpop.f32.mrb[0].mxu0
      %846 = vmatprep.mubr.bf16.mxu0 0
      %847 = vmatmul.mubr.bf16.gmra.mrb[0].mxu0 %v742
      %v848 = vpop.f32.mrb[0].mxu0
      %v849 = vadd.f32 %v712, %v848
      %v850 = vpop.f32.mrb[0].mxu0
      %v851 = vpop.f32.mrb[0].mxu0
      %v852 = vadd.f32 %v712, %v851
      %v853 = vpop.f32.mrb[0].mxu0
      %854 = vmatprep.mubr.bf16.mxu0 0
      %855 = vmatmul.mubr.bf16.gmra.mrb[0].mxu0 %v745
      %v856 = vpop.f32.mrb[0].mxu0
      %v857 = vadd.f32 %v712, %v856
      %v858 = vpop.f32.mrb[0].mxu0
      %v859 = vpop.f32.mrb[0].mxu0
      %v860 = vadd.f32 %v712, %v859
      %v861 = vpop.f32.mrb[0].mxu0
      %862 = vmatprep.mubr.bf16.mxu0 0
      %863 = vmatmul.mubr.bf16.gmra.mrb[0].mxu0 %v748
      %v864 = vpop.f32.mrb[0].mxu0
      %v865 = vadd.f32 %v712, %v864
      %v866 = vpop.f32.mrb[0].mxu0
      %v867 = vpop.f32.mrb[0].mxu0
      %v868 = vadd.f32 %v712, %v867
      %v869 = vpop.f32.mrb[0].mxu0
      %870 = vmatprep.mubr.bf16.mxu0 0
      %871 = vmatmul.mubr.bf16.gmra.mrb[0].mxu0 %v751
      %v872 = vpop.f32.mrb[0].mxu0
      %v873 = vadd.f32 %v712, %v872
      %v874 = vpop.f32.mrb[0].mxu0
      %v875 = vpop.f32.mrb[0].mxu0
      %v876 = vadd.f32 %v712, %v875
      %v877 = vpop.f32.mrb[0].mxu0
      %878 = vmatprep.mubr.bf16.mxu0 0
      %879 = vmatmul.mubr.bf16.gmra.mrb[0].mxu0 %v754
      %v880 = vpop.f32.mrb[0].mxu0
      %v881 = vadd.f32 %v712, %v880
      %v882 = vpop.f32.mrb[0].mxu0
      %v883 = vpop.f32.mrb[0].mxu0
      %v884 = vadd.f32 %v712, %v883
      %v885 = vpop.f32.mrb[0].mxu0
      %886 = vmatprep.mubr.bf16.mxu0 0
      %887 = vmatmul.mubr.bf16.gmra.mrb[0].mxu0 %v757
      %v888 = vpop.f32.mrb[0].mxu0
      %v889 = vadd.f32 %v712, %v888
      %v890 = vpop.f32.mrb[0].mxu0
      %v891 = vpop.f32.mrb[0].mxu0
      %v892 = vadd.f32 %v712, %v891
      %v893 = vpop.f32.mrb[0].mxu0
      %894 = vmatprep.mubr.bf16.mxu0 0
      %895 = vmatmul.mubr.bf16.gmra.mrb[0].mxu0 %v760
      %v896 = vpop.f32.mrb[0].mxu0
      %v897 = vadd.f32 %v712, %v896
      %v898 = vpop.f32.mrb[0].mxu0
      %v899 = vpop.f32.mrb[0].mxu0
      %v900 = vadd.f32 %v712, %v899
      %v901 = vpop.f32.mrb[0].mxu0
      %902 = vmatprep.mubr.bf16.mxu0 0
      %903 = vmatmul.mubr.bf16.gmra.mrb[0].mxu0 %v763
      %v904 = vpop.f32.mrb[0].mxu0
      %v905 = vadd.f32 %v712, %v904
      %v906 = vpop.f32.mrb[0].mxu0
      %v907 = vpop.f32.mrb[0].mxu0
      %v908 = vadd.f32 %v712, %v907
      %v909 = vpop.f32.mrb[0].mxu0
      %910 = vmatprep.mubr.bf16.mxu0 0
      %911 = vmatmul.mubr.bf16.gmra.mrb[0].mxu0 %v766
      %v912 = vpop.f32.mrb[0].mxu0
      %v913 = vadd.f32 %v712, %v912
      %v914 = vpop.f32.mrb[0].mxu0
      %v915 = vpop.f32.mrb[0].mxu0
      %v916 = vadd.f32 %v712, %v915
      %v917 = vpop.f32.mrb[0].mxu0
      %918 = vmatprep.mubr.bf16.mxu0 0
      %919 = vmatmul.mubr.bf16.gmra.mrb[0].mxu0 %v769
      %v920 = vpop.f32.mrb[0].mxu0
      %v921 = vadd.f32 %v712, %v920
      %v922 = vpop.f32.mrb[0].mxu0
      %v923 = vpop.f32.mrb[0].mxu0
      %v924 = vadd.f32 %v712, %v923
      %v925 = vpop.f32.mrb[0].mxu0
      %926 = vmatprep.mubr.bf16.mxu0 0
      %927 = vmatmul.mubr.bf16.gmra.mrb[0].mxu0 %v772
      %v928 = vpop.f32.mrb[0].mxu0
      %v929 = vadd.f32 %v712, %v928
      %v930 = vpop.f32.mrb[0].mxu0
      %v931 = vpop.f32.mrb[0].mxu0
      %v932 = vadd.f32 %v712, %v931
      %v933 = vpop.f32.mrb[0].mxu0
      %934 = vdwg.mxu0
      %vm935 = vcmp.ge.f32.partialorder %v809, 0.0
      %vm936 = vcmp.ge.f32.partialorder %v812, 0.0
      %vm937 = vcmp.ge.f32.partialorder %v817, 0.0
      %vm938 = vcmp.ge.f32.partialorder %v820, 0.0
      %vm939 = vcmp.ge.f32.partialorder %v825, 0.0
      %vm940 = vcmp.ge.f32.partialorder %v828, 0.0
      %vm941 = vcmp.ge.f32.partialorder %v833, 0.0
      %vm942 = vcmp.ge.f32.partialorder %v836, 0.0
      %vm943 = vcmp.ge.f32.partialorder %v841, 0.0
      %vm944 = vcmp.ge.f32.partialorder %v844, 0.0
      %vm945 = vcmp.ge.f32.partialorder %v849, 0.0
      %vm946 = vcmp.ge.f32.partialorder %v852, 0.0
      %vm947 = vcmp.ge.f32.partialorder %v857, 0.0
      %vm948 = vcmp.ge.f32.partialorder %v860, 0.0
      %vm949 = vcmp.ge.f32.partialorder %v865, 0.0
      %vm950 = vcmp.ge.f32.partialorder %v868, 0.0
      %vm951 = vcmp.ge.f32.partialorder %v873, 0.0
      %vm952 = vcmp.ge.f32.partialorder %v876, 0.0
      %vm953 = vcmp.ge.f32.partialorder %v881, 0.0
      %vm954 = vcmp.ge.f32.partialorder %v884, 0.0
      %vm955 = vcmp.ge.f32.partialorder %v889, 0.0
      %vm956 = vcmp.ge.f32.partialorder %v892, 0.0
      %vm957 = vcmp.ge.f32.partialorder %v897, 0.0
      %vm958 = vcmp.ge.f32.partialorder %v900, 0.0
      %vm959 = vcmp.ge.f32.partialorder %v905, 0.0
      %vm960 = vcmp.ge.f32.partialorder %v908, 0.0
      %vm961 = vcmp.ge.f32.partialorder %v913, 0.0
      %vm962 = vcmp.ge.f32.partialorder %v916, 0.0
      %vm963 = vcmp.ge.f32.partialorder %v921, 0.0
      %vm964 = vcmp.ge.f32.partialorder %v924, 0.0
      %vm965 = vcmp.ge.f32.partialorder %v929, 0.0
      %vm966 = vcmp.ge.f32.partialorder %v932, 0.0
      %v967 = vmul.f32 %v809, 0.01
      %v968 = vmul.f32 %v812, 0.01
      %v969 = vmul.f32 %v817, 0.01
      %v970 = vmul.f32 %v820, 0.01
      %v971 = vmul.f32 %v825, 0.01
      %v972 = vmul.f32 %v828, 0.01
      %v973 = vmul.f32 %v833, 0.01
      %v974 = vmul.f32 %v836, 0.01
      %v975 = vmul.f32 %v841, 0.01
      %v976 = vmul.f32 %v844, 0.01
      %v977 = vmul.f32 %v849, 0.01
      %v978 = vmul.f32 %v852, 0.01
      %v979 = vmul.f32 %v857, 0.01
      %v980 = vmul.f32 %v860, 0.01
      %v981 = vmul.f32 %v865, 0.01
      %v982 = vmul.f32 %v868, 0.01
      %v983 = vmul.f32 %v873, 0.01
      %v984 = vmul.f32 %v876, 0.01
      %v985 = vmul.f32 %v881, 0.01
      %v986 = vmul.f32 %v884, 0.01
      %v987 = vmul.f32 %v889, 0.01
      %v988 = vmul.f32 %v892, 0.01
      %v989 = vmul.f32 %v897, 0.01
      %v990 = vmul.f32 %v900, 0.01
      %v991 = vmul.f32 %v905, 0.01
      %v992 = vmul.f32 %v908, 0.01
      %v993 = vmul.f32 %v913, 0.01
      %v994 = vmul.f32 %v916, 0.01
      %v995 = vmul.f32 %v921, 0.01
      %v996 = vmul.f32 %v924, 0.01
      %v997 = vmul.f32 %v929, 0.01
      %v998 = vmul.f32 %v932, 0.01
      %v999 = vsel %vm935, %v809, %v967
      %v1000 = vsel %vm936, %v812, %v968
      %v1001 = vsel %vm937, %v817, %v969
      %v1002 = vsel %vm938, %v820, %v970
      %v1003 = vsel %vm939, %v825, %v971
      %v1004 = vsel %vm940, %v828, %v972
      %v1005 = vsel %vm941, %v833, %v973
      %v1006 = vsel %vm942, %v836, %v974
      %v1007 = vsel %vm943, %v841, %v975
      %v1008 = vsel %vm944, %v844, %v976
      %v1009 = vsel %vm945, %v849, %v977
      %v1010 = vsel %vm946, %v852, %v978
      %v1011 = vsel %vm947, %v857, %v979
      %v1012 = vsel %vm948, %v860, %v980
      %v1013 = vsel %vm949, %v865, %v981
      %v1014 = vsel %vm950, %v868, %v982
      %v1015 = vsel %vm951, %v873, %v983
      %v1016 = vsel %vm952, %v876, %v984
      %v1017 = vsel %vm953, %v881, %v985
      %v1018 = vsel %vm954, %v884, %v986
      %v1019 = vsel %vm955, %v889, %v987
      %v1020 = vsel %vm956, %v892, %v988
      %v1021 = vsel %vm957, %v897, %v989
      %v1022 = vsel %vm958, %v900, %v990
      %v1023 = vsel %vm959, %v905, %v991
      %v1024 = vsel %vm960, %v908, %v992
      %v1025 = vsel %vm961, %v913, %v993
      %v1026 = vsel %vm962, %v916, %v994
      %v1027 = vsel %vm963, %v921, %v995
      %v1028 = vsel %vm964, %v924, %v996
      %v1029 = vsel %vm965, %v929, %v997
      %v1030 = vsel %vm966, %v932, %v998
      %v1031 = vpack.c.bf16 %v1000, %v999
      %v1032 = vpack.c.bf16 %v1002, %v1001
      %v1033 = vpack.c.bf16 %v1004, %v1003
      %v1034 = vpack.c.bf16 %v1006, %v1005
      %v1035 = vpack.c.bf16 %v1008, %v1007
      %v1036 = vpack.c.bf16 %v1010, %v1009
      %v1037 = vpack.c.bf16 %v1012, %v1011
      %v1038 = vpack.c.bf16 %v1014, %v1013
      %v1039 = vpack.c.bf16 %v1016, %v1015
      %v1040 = vpack.c.bf16 %v1018, %v1017
      %v1041 = vpack.c.bf16 %v1020, %v1019
      %v1042 = vpack.c.bf16 %v1022, %v1021
      %v1043 = vpack.c.bf16 %v1024, %v1023
      %v1044 = vpack.c.bf16 %v1026, %v1025
      %v1045 = vpack.c.bf16 %v1028, %v1027
      %v1046 = vpack.c.bf16 %v1030, %v1029
      %v1063 = vunpack.c.l.b16 %v1031
      %v1064 = vunpack.c.h.b16 %v1031
      %v1065 = vunpack.c.l.b16 %v1032
      %v1066 = vunpack.c.h.b16 %v1032
      %v1067 = vunpack.c.l.b16 %v1033
      %v1068 = vunpack.c.h.b16 %v1033
      %v1069 = vunpack.c.l.b16 %v1034
      %v1070 = vunpack.c.h.b16 %v1034
      %v1071 = vunpack.c.l.b16 %v1035
      %v1072 = vunpack.c.h.b16 %v1035
      %v1073 = vunpack.c.l.b16 %v1036
      %v1074 = vunpack.c.h.b16 %v1036
      %v1075 = vunpack.c.l.b16 %v1037
      %v1076 = vunpack.c.h.b16 %v1037
      %v1077 = vunpack.c.l.b16 %v1038
      %v1078 = vunpack.c.h.b16 %v1038
      %v1079 = vunpack.c.l.b16 %v1039
      %v1080 = vunpack.c.h.b16 %v1039
      %v1081 = vunpack.c.l.b16 %v1040
      %v1082 = vunpack.c.h.b16 %v1040
      %v1083 = vunpack.c.l.b16 %v1041
      %v1084 = vunpack.c.h.b16 %v1041
      %v1085 = vunpack.c.l.b16 %v1042
      %v1086 = vunpack.c.h.b16 %v1042
      %v1087 = vunpack.c.l.b16 %v1043
      %v1088 = vunpack.c.h.b16 %v1043
      %v1089 = vunpack.c.l.b16 %v1044
      %v1090 = vunpack.c.h.b16 %v1044
      %v1091 = vunpack.c.l.b16 %v1045
      %v1092 = vunpack.c.h.b16 %v1045
      %v1093 = vunpack.c.l.b16 %v1046
      %v1094 = vunpack.c.h.b16 %v1046
      %v1095 = vpack.c.b16 %v1063, %v1063
      %v1096 = vpack.c.b16 %v1064, %v1064
      %v1097 = vpack.c.b16 %v1065, %v1065
      %v1098 = vpack.c.b16 %v1066, %v1066
      %v1099 = vpack.c.b16 %v1067, %v1067
      %v1100 = vpack.c.b16 %v1068, %v1068
      %v1101 = vpack.c.b16 %v1069, %v1069
      %v1102 = vpack.c.b16 %v1070, %v1070
      %v1103 = vpack.c.b16 %v1071, %v1071
      %v1104 = vpack.c.b16 %v1072, %v1072
      %v1105 = vpack.c.b16 %v1073, %v1073
      %v1106 = vpack.c.b16 %v1074, %v1074
      %v1107 = vpack.c.b16 %v1075, %v1075
      %v1108 = vpack.c.b16 %v1076, %v1076
      %v1109 = vpack.c.b16 %v1077, %v1077
      %v1110 = vpack.c.b16 %v1078, %v1078
      %v1111 = vpack.c.b16 %v1079, %v1079
      %v1112 = vpack.c.b16 %v1080, %v1080
      %v1113 = vpack.c.b16 %v1081, %v1081
      %v1114 = vpack.c.b16 %v1082, %v1082
      %v1115 = vpack.c.b16 %v1083, %v1083
      %v1116 = vpack.c.b16 %v1084, %v1084
      %v1117 = vpack.c.b16 %v1085, %v1085
      %v1118 = vpack.c.b16 %v1086, %v1086
      %v1119 = vpack.c.b16 %v1087, %v1087
      %v1120 = vpack.c.b16 %v1088, %v1088
      %v1121 = vpack.c.b16 %v1089, %v1089
      %v1122 = vpack.c.b16 %v1090, %v1090
      %v1123 = vpack.c.b16 %v1091, %v1091
      %v1124 = vpack.c.b16 %v1092, %v1092
      %v1125 = vpack.c.b16 %v1093, %v1093
      %v1126 = vpack.c.b16 %v1094, %v1094
      %vm1159 = vcmask 257024
      %1160 = vst.msk [vmem:[%s4] sm:$0xf] %vm1159, %v1095
      %1161 = vst.msk [vmem:[%s4 + $0x4] sm:$0xf] %vm1159, %v1096
      %1162 = vst.msk [vmem:[%s4 + $0x8] sm:$0xf] %vm1159, %v1097
      %1163 = vst.msk [vmem:[%s4 + $0xc] sm:$0xf] %vm1159, %v1098
      %1164 = vst.msk [vmem:[%s4 + $0x10] sm:$0xf] %vm1159, %v1099
      %1165 = vst.msk [vmem:[%s4 + $0x14] sm:$0xf] %vm1159, %v1100
      %1166 = vst.msk [vmem:[%s4 + $0x18] sm:$0xf] %vm1159, %v1101
      %1167 = vst.msk [vmem:[%s4 + $0x1c] sm:$0xf] %vm1159, %v1102
      %1168 = vst.msk [vmem:[%s4 + $0x20] sm:$0xf] %vm1159, %v1103
      %1169 = vst.msk [vmem:[%s4 + $0x24] sm:$0xf] %vm1159, %v1104
      %1170 = vst.msk [vmem:[%s4 + $0x28] sm:$0xf] %vm1159, %v1105
      %1171 = vst.msk [vmem:[%s4 + $0x2c] sm:$0xf] %vm1159, %v1106
      %1172 = vst.msk [vmem:[%s4 + $0x30] sm:$0xf] %vm1159, %v1107
      %1173 = vst.msk [vmem:[%s4 + $0x34] sm:$0xf] %vm1159, %v1108
      %1174 = vst.msk [vmem:[%s4 + $0x38] sm:$0xf] %vm1159, %v1109
      %1175 = vst.msk [vmem:[%s4 + $0x3c] sm:$0xf] %vm1159, %v1110
      %1176 = vst.msk [vmem:[%s4 + $0x40] sm:$0xf] %vm1159, %v1111
      %1177 = vst.msk [vmem:[%s4 + $0x44] sm:$0xf] %vm1159, %v1112
      %1178 = vst.msk [vmem:[%s4 + $0x48] sm:$0xf] %vm1159, %v1113
      %1179 = vst.msk [vmem:[%s4 + $0x4c] sm:$0xf] %vm1159, %v1114
      %1180 = vst.msk [vmem:[%s4 + $0x50] sm:$0xf] %vm1159, %v1115
      %1181 = vst.msk [vmem:[%s4 + $0x54] sm:$0xf] %vm1159, %v1116
      %1182 = vst.msk [vmem:[%s4 + $0x58] sm:$0xf] %vm1159, %v1117
      %1183 = vst.msk [vmem:[%s4 + $0x5c] sm:$0xf] %vm1159, %v1118
      %1184 = vst.msk [vmem:[%s4 + $0x60] sm:$0xf] %vm1159, %v1119
      %1185 = vst.msk [vmem:[%s4 + $0x64] sm:$0xf] %vm1159, %v1120
      %1186 = vst.msk [vmem:[%s4 + $0x68] sm:$0xf] %vm1159, %v1121
      %1187 = vst.msk [vmem:[%s4 + $0x6c] sm:$0xf] %vm1159, %v1122
      %1188 = vst.msk [vmem:[%s4 + $0x70] sm:$0xf] %vm1159, %v1123
      %1189 = vst.msk [vmem:[%s4 + $0x74] sm:$0xf] %vm1159, %v1124
      %1190 = vst.msk [vmem:[%s4 + $0x78] sm:$0xf] %vm1159, %v1125
      %1191 = vst.msk [vmem:[%s4 + $0x7c] sm:$0xf] %vm1159, %v1126
    $region29: #{tpu_custom_call.1} parent=1 // pred_fallthru
      _
    // Predicated region
    $region30: #{tpu_custom_call.1} parent=1 // pred_check
      _
    $region31: #{tpu_custom_call.1} parent=1 // pred_check_branch
      %1193 = sbr.rel (0) target = $region33
    $region32: #{tpu_custom_call.1} parent=1 // pred_region
      _
    $region33: #{tpu_custom_call.1} parent=1 // pred_fallthru
      _
    // Predicated region
    $region34: #{tpu_custom_call.1} parent=1 // pred_check
      _
    $region35: #{tpu_custom_call.1} parent=1 // pred_check_branch
      %1195 = sbr.rel (0) target = $region37
    $region36: #{tpu_custom_call.1} parent=1 // pred_region
      _
    $region37: #{tpu_custom_call.1} parent=1 // pred_fallthru
      _
    %1196 = vsyncpa [#allocation4], 1

</llo_original>
